<compile_context>
chip_gen: v7x
topology: tpu7x:2x2x1
jax: 0.10.0
libtpu: 0.0.40
codegen_flags: <defaults>
</compile_context>

<pallas_src>
import functools

import jax
import jax.numpy as jnp
from jax import lax
from jax.experimental import pallas as pl
from jax.experimental.pallas import tpu as pltpu

_LANES = 128
_SUBLANES = 8
_ALIGN = _SUBLANES * _LANES  # 1024 elements


def _cdiv(a, b):
    return -(-a // b)


def _round_up(n, m):
    return _cdiv(n, m) * m


def _pick_n_acc(tile_rows):
    """Largest k in {8,4,2,1} with tile_rows % (8*k) == 0 (independent acc chains)."""
    for k in (8, 4, 2, 1):
        if tile_rows % (k * _SUBLANES) == 0:
            return k
    return 1


def _vmem_budget():
    """(physical VMEM capacity, scoped-VMEM limit to request) in bytes."""
    cap = 64 * 1024 * 1024  # conservative default (v7x per-TC VMEM)
    try:
        cap = int(pltpu.get_tpu_info().vmem_capacity_bytes)
    except Exception:
        pass
    limit = max(min(cap - 16 * 1024 * 1024, (cap * 4) // 5), cap // 2)
    return cap, limit


# --------------------------------------------------------------------------
# Fused pipelined path: grid = (2 phases, steps).  Phase 0 streams tiles in,
# stashes them in a VMEM slab scratch and accumulates the sum; phase 1 reads
# the slab, subtracts the mean and streams tiles out.  2N HBM traffic with
# DMA/compute overlap.
# --------------------------------------------------------------------------
def _fused_center_kernel(x_ref, o_ref, slab_ref, acc_ref, *,
                         steps, tile_rows, n_acc, inv_total, valid_last):
    p = pl.program_id(0)
    i = pl.program_id(1)

    @pl.when(p == 0)
    def _load_and_sum():
        @pl.when(i == 0)
        def _():
            acc_ref[...] = jnp.zeros_like(acc_ref)

        x = x_ref[...]
        slab_ref[i] = x                      # keep the tile VMEM-resident
        xf = x.astype(jnp.float32)
        if valid_last != tile_rows:          # static: only emitted when ragged
            limit = jnp.where(i == steps - 1, valid_last, tile_rows)
            rid = lax.broadcasted_iota(jnp.int32, xf.shape, 0)
            xf = jnp.where(rid < limit, xf, 0.0)
        # n_acc independent (8,128) accumulator chains (breaks the serial
        # vadd dependency that binds on v7x's faster HBM).
        acc_ref[...] += jnp.sum(
            xf.reshape(-1, n_acc * _SUBLANES, xf.shape[-1]), axis=0)

    @pl.when(p == 1)
    def _center_and_store():
        mean = jnp.sum(acc_ref[...]) * inv_total   # true element count
        xf = slab_ref[i].astype(jnp.float32)
        o_ref[...] = (xf - mean).astype(o_ref.dtype)


# --------------------------------------------------------------------------
# Streaming two-pass path (large inputs).
# Pass 1: per-split (n_acc*8, 128) f32 partial sums; split axis is "parallel".
# --------------------------------------------------------------------------
def _partial_sum_kernel(x_ref, part_ref, *, steps_per_split, steps_total,
                        tile_rows, valid_last, n_acc, mask_needed):
    s = pl.program_id(0)
    i = pl.program_id(1)

    @pl.when(i == 0)
    def _():
        part_ref[...] = jnp.zeros_like(part_ref)

    x = x_ref[...].astype(jnp.float32)
    if mask_needed:                          # static: only emitted when ragged
        g = s * steps_per_split + i
        limit = jnp.where(g >= steps_total, 0,
                          jnp.where(g == steps_total - 1, valid_last, tile_rows))
        rid = lax.broadcasted_iota(jnp.int32, x.shape, 0)
        x = jnp.where(rid < limit, x, 0.0)
    part_ref[...] += jnp.sum(
        x.reshape(-1, n_acc * _SUBLANES, x.shape[-1]), axis=0)


# Pass 2: subtract the loop-invariant scalar mean (SMEM operand).
def _center_kernel(mean_ref, x_ref, o_ref):
    mean = mean_ref[0, 0]
    o_ref[...] = (x_ref[...].astype(jnp.float32) - mean).astype(o_ref.dtype)


def centered_layer(x, *, tile_rows=8192, fused_max_slab_bytes=None):
    """Pallas equivalent of CenteredLayer.forward: x - x.mean()."""
    orig_shape = x.shape
    dtype = x.dtype
    total = int(x.size)
    if total == 0:
        return x
    itemsize = jnp.dtype(dtype).itemsize

    cap, vmem_limit = _vmem_budget()

    # ---- lane-dense slab view (copy-free whenever total % 1024 == 0) --------
    x1d = x.reshape(-1)
    if total % _ALIGN == 0:
        rows = total // _LANES
        x2d = x1d.reshape(rows, _LANES)               # free bitcast reshape
        padded = False
    else:
        padded_total = _round_up(total, _ALIGN)       # pad only to 8x128
        x2d = jnp.pad(x1d, (0, padded_total - total)).reshape(-1, _LANES)
        rows = padded_total // _LANES
        padded = True

    # ---- tiling parameters ---------------------------------------------------
    t = max(_SUBLANES, _round_up(int(tile_rows), _SUBLANES))
    t = min(t, rows)                                  # rows is a multiple of 8
    steps = _cdiv(rows, t)
    valid_last = rows - (steps - 1) * t               # multiple of 8
    n_acc = _pick_n_acc(t)
    inv_total = 1.0 / total

    # ---- generation-aware fused threshold ------------------------------------
    tile_bytes = t * _LANES * itemsize
    fused_overhead = 4 * tile_bytes + t * _LANES * 4 + (2 << 20)
    fused_cap = (3 * cap) // 8        # ~48 MiB on 128-MiB chips, ~24 MiB on v7x
    if fused_max_slab_bytes is None:
        fused_max = max(0, min(vmem_limit - fused_overhead, fused_cap))
    else:
        fused_max = fused_max_slab_bytes
    slab_scratch_bytes = steps * t * _LANES * itemsize

    if slab_scratch_bytes <= fused_max:
        # ---------------- fused pipelined path --------------------------------
        out2d = pl.pallas_call(
            functools.partial(
                _fused_center_kernel, steps=steps, tile_rows=t, n_acc=n_acc,
                inv_total=inv_total, valid_last=valid_last),
            out_shape=jax.ShapeDtypeStruct((rows, _LANES), dtype),
            grid_spec=pltpu.PrefetchScalarGridSpec(
                num_scalar_prefetch=0,
                grid=(2, steps),
                # phase 0: stream tile i; phase 1: hold the last block (no refetch)
                in_specs=[pl.BlockSpec(
                    (t, _LANES),
                    lambda p, i: (i * (1 - p) + (steps - 1) * p, 0))],
                # phase 0: park on block 0 (never written back early);
                # phase 1: stream tile i out
                out_specs=pl.BlockSpec((t, _LANES), lambda p, i: (i * p, 0)),
                scratch_shapes=[
                    pltpu.VMEM((steps, t, _LANES), dtype),              # slab
                    pltpu.VMEM((n_acc * _SUBLANES, _LANES), jnp.float32),  # acc
                ],
            ),
            compiler_params=pltpu.CompilerParams(
                dimension_semantics=("arbitrary", "arbitrary"),
                vmem_limit_bytes=vmem_limit),
        )(x2d)
    else:
        # ---------------- streaming two-pass path -----------------------------
        n_split = 2 if steps >= 2 else 1
        sps = _cdiv(steps, n_split)
        mask_needed = (n_split * sps != steps) or (valid_last != t)

        if n_split * sps == steps:
            in_idx = lambda s, i: (s * sps + i, 0)
        else:  # clamp the (at most one) over-hanging step onto the last block
            in_idx = lambda s, i: (jnp.minimum(s * sps + i, steps - 1), 0)

        partials = pl.pallas_call(
            functools.partial(
                _partial_sum_kernel, steps_per_split=sps, steps_total=steps,
                tile_rows=t, valid_last=valid_last, n_acc=n_acc,
                mask_needed=mask_needed),
            out_shape=jax.ShapeDtypeStruct(
                (n_split * n_acc * _SUBLANES, _LANES), jnp.float32),
            grid_spec=pltpu.PrefetchScalarGridSpec(
                num_scalar_prefetch=0,
                grid=(n_split, sps),
                in_specs=[pl.BlockSpec((t, _LANES), in_idx)],
                out_specs=pl.BlockSpec(
                    (n_acc * _SUBLANES, _LANES), lambda s, i: (s, 0)),
            ),
            compiler_params=pltpu.CompilerParams(
                dimension_semantics=("parallel", "arbitrary"),
                vmem_limit_bytes=vmem_limit),
        )(x2d)

        mean2d = (jnp.sum(partials, dtype=jnp.float32) * inv_total
                  ).astype(jnp.float32).reshape(1, 1)

        out2d = pl.pallas_call(
            _center_kernel,
            out_shape=jax.ShapeDtypeStruct((rows, _LANES), dtype),
            grid_spec=pltpu.PrefetchScalarGridSpec(
                num_scalar_prefetch=0,
                grid=(steps,),
                in_specs=[pl.BlockSpec(memory_space=pltpu.SMEM),
                          pl.BlockSpec((t, _LANES), lambda i: (i, 0))],
                out_specs=pl.BlockSpec((t, _LANES), lambda i: (i, 0)),
            ),
            compiler_params=pltpu.CompilerParams(
                dimension_semantics=("parallel",),
                vmem_limit_bytes=vmem_limit),
        )(mean2d, x2d)

    out1d = out2d.reshape(-1)
    if padded:
        out1d = out1d[:total]
    return out1d.reshape(orig_shape)


if __name__ == "__main__":
    key = jax.random.PRNGKey(0)
    k0, k1, k2 = jax.random.split(key, 3)

    # Small NCHW input -> fused pipelined path (single step).
    x = jax.random.normal(k0, (2, 4, 16, 16), dtype=jnp.float32)
    ref = x - jnp.mean(x)
    out = jax.block_until_ready(centered_layer(x))
    assert out.shape == x.shape and out.dtype == x.dtype
    assert jnp.allclose(out, ref, atol=1e-5, rtol=1e-5)

    # Force the streaming two-pass path (even split, no masking).
    out2 = jax.block_until_ready(
        centered_layer(x, tile_rows=8, fused_max_slab_bytes=0))
    assert jnp.allclose(out2, ref, atol=1e-5, rtol=1e-5)

    # Ragged total (not a multiple of 128): minimal-pad fallback path.
    xr = jax.random.normal(k1, (2, 3, 5, 7), dtype=jnp.float32)
    outr = jax.block_until_ready(centered_layer(xr))
    assert jnp.allclose(outr, xr - jnp.mean(xr), atol=1e-5, rtol=1e-5)

    # Fused pipelined path with several tiles and a partial last tile
    # (rows=2400, tile=512 -> 5 steps, masked 352-row last tile).
    xf = jax.random.normal(k2, (1, 4, 240, 320), dtype=jnp.float32)
    outf = jax.block_until_ready(centered_layer(xf, tile_rows=512))
    assert jnp.allclose(outf, xf - jnp.mean(xf), atol=1e-5, rtol=1e-5)

    # Streaming path with an uneven split and a masked last tile
    # (rows=4096, tile=640 -> 7 steps: split0 gets 4, split1 gets 3).
    xm = jax.random.normal(k2, (1, 8, 256, 256), dtype=jnp.float32)
    outm = jax.block_until_ready(
        centered_layer(xm, tile_rows=640, fused_max_slab_bytes=0))
    assert jnp.allclose(outm, xm - jnp.mean(xm), atol=1e-5, rtol=1e-5)

    print("KERNEL_OK")
</pallas_src>

<mosaic_0001>
module attributes {stable_mosaic.version = 11 : i64} {
  func.func @_fused_center_kernel(%arg0: i32, %arg1: i32, %arg2: memref<16x128xf32, #tpu.memory_space<vmem>>, %arg3: memref<16x128xf32, #tpu.memory_space<vmem>>, %arg4: memref<1x16x128xf32, #tpu.memory_space<vmem>>, %arg5: memref<16x128xf32, #tpu.memory_space<vmem>>) attributes {dimension_semantics = [#tpu.dimension_semantics<arbitrary>, #tpu.dimension_semantics<arbitrary>], iteration_bounds = array<i64: 2, 1>, scalar_prefetch = 0 : i64, scratch_operands = 2 : i64, tpu.core_type = #tpu.core_type<tc>, window_params = [{transform_indices = @transform_0, window_bounds = array<i64: 16, 128>}, {transform_indices = @transform_1, window_bounds = array<i64: 16, 128>}]} {
    %c0_i32 = arith.constant 0 : i32
    %0 = arith.cmpi eq, %arg0, %c0_i32 : i32
    %1 = arith.extui %0 : i1 to i32
    %c0_i32_0 = arith.constant 0 : i32
    %2 = arith.cmpi ne, %1, %c0_i32_0 : i32
    scf.if %2 {
      %c0_i32_2 = arith.constant 0 : i32
      %6 = arith.cmpi eq, %arg1, %c0_i32_2 : i32
      %7 = arith.extui %6 : i1 to i32
      %c0_i32_3 = arith.constant 0 : i32
      %8 = arith.cmpi ne, %7, %c0_i32_3 : i32
      scf.if %8 {
        %cst_11 = arith.constant 0.000000e+00 : f32
        %19 = vector.broadcast %cst_11 : f32 to vector<16x128xf32>
        %c0_12 = arith.constant 0 : index
        %c0_13 = arith.constant 0 : index
        %20 = vector.load %arg5[%c0_12, %c0_13] : memref<16x128xf32, #tpu.memory_space<vmem>>, vector<16x128xf32>
        tpu.vector_store %arg5[%c0_12, %c0_13], %19 {strides = array<i32>} : memref<16x128xf32, #tpu.memory_space<vmem>>, vector<16x128xf32>,
      } else {
      }
      %c0 = arith.constant 0 : index
      %c0_4 = arith.constant 0 : index
      %9 = vector.load %arg2[%c0, %c0_4] : memref<16x128xf32, #tpu.memory_space<vmem>>, vector<16x128xf32>
      %10 = arith.index_cast %arg1 : i32 to index
      %c0_5 = arith.constant 0 : index
      %c0_6 = arith.constant 0 : index
      %11 = vector.load %arg4[%10, %c0_5, %c0_6] : memref<1x16x128xf32, #tpu.memory_space<vmem>>, vector<1x16x128xf32>
      %12 = vector.shape_cast %11 : vector<1x16x128xf32> to vector<16x128xf32>
      %13 = vector.shape_cast %9 : vector<16x128xf32> to vector<1x16x128xf32>
      tpu.vector_store %arg4[%10, %c0_5, %c0_6], %13 {strides = array<i32>} : memref<1x16x128xf32, #tpu.memory_space<vmem>>, vector<1x16x128xf32>,
      %c0_7 = arith.constant 0 : index
      %c0_8 = arith.constant 0 : index
      %14 = vector.load %arg5[%c0_7, %c0_8] : memref<16x128xf32, #tpu.memory_space<vmem>>, vector<16x128xf32>
      %15 = vector.shape_cast %9 : vector<16x128xf32> to vector<1x16x128xf32>
      %cst = arith.constant dense<0.000000e+00> : vector<16x128xf32>
      %16 = vector.multi_reduction <add>, %15, %cst [0] : vector<1x16x128xf32> to vector<16x128xf32>
      %17 = arith.addf %14, %16 : vector<16x128xf32>
      %c0_9 = arith.constant 0 : index
      %c0_10 = arith.constant 0 : index
      %18 = vector.load %arg5[%c0_9, %c0_10] : memref<16x128xf32, #tpu.memory_space<vmem>>, vector<16x128xf32>
      tpu.vector_store %arg5[%c0_9, %c0_10], %17 {strides = array<i32>} : memref<16x128xf32, #tpu.memory_space<vmem>>, vector<16x128xf32>,
    } else {
    }
    %c1_i32 = arith.constant 1 : i32
    %3 = arith.cmpi eq, %arg0, %c1_i32 : i32
    %4 = arith.extui %3 : i1 to i32
    %c0_i32_1 = arith.constant 0 : i32
    %5 = arith.cmpi ne, %4, %c0_i32_1 : i32
    scf.if %5 {
      %c0 = arith.constant 0 : index
      %c0_2 = arith.constant 0 : index
      %6 = vector.load %arg5[%c0, %c0_2] : memref<16x128xf32, #tpu.memory_space<vmem>>, vector<16x128xf32>
      %7 = vector.shape_cast %6 : vector<16x128xf32> to vector<1x16x128xf32>
      %cst = arith.constant dense<0.000000e+00> : vector<1xf32>
      %8 = vector.multi_reduction <add>, %7, %cst [1, 2] : vector<1x16x128xf32> to vector<1xf32>
      %9 = vector.shape_cast %8 : vector<1xf32> to vector<1x1x1xf32>
      %10 = vector.extract %9[0, 0, 0] : f32 from vector<1x1x1xf32>
      %cst_3 = arith.constant 4.8828125E-4 : f32
      %11 = arith.mulf %10, %cst_3 : f32
      %12 = arith.index_cast %arg1 : i32 to index
      %c0_4 = arith.constant 0 : index
      %c0_5 = arith.constant 0 : index
      %13 = vector.load %arg4[%12, %c0_4, %c0_5] : memref<1x16x128xf32, #tpu.memory_space<vmem>>, vector<1x16x128xf32>
      %14 = vector.shape_cast %13 : vector<1x16x128xf32> to vector<16x128xf32>
      %15 = vector.broadcast %11 : f32 to vector<16x128xf32>
      %16 = arith.subf %14, %15 : vector<16x128xf32>
      %c0_6 = arith.constant 0 : index
      %c0_7 = arith.constant 0 : index
      %17 = vector.load %arg3[%c0_6, %c0_7] : memref<16x128xf32, #tpu.memory_space<vmem>>, vector<16x128xf32>
      tpu.vector_store %arg3[%c0_6, %c0_7], %16 {strides = array<i32>} : memref<16x128xf32, #tpu.memory_space<vmem>>, vector<16x128xf32>,
    } else {
    }
    return
  }
  func.func @transform_0(%arg0: i32, %arg1: i32) -> (i32, i32) {
    %c1_i32 = arith.constant 1 : i32
    %0 = arith.subi %c1_i32, %arg0 : i32
    %1 = arith.muli %arg1, %0 : i32
    %c0_i32 = arith.constant 0 : i32
    %2 = arith.muli %c0_i32, %arg0 : i32
    %3 = arith.addi %1, %2 : i32
    %c0_i32_0 = arith.constant 0 : i32
    %c0_i32_1 = arith.constant 0 : i32
    return %3, %c0_i32_0 : i32, i32
  }
  func.func @transform_1(%arg0: i32, %arg1: i32) -> (i32, i32) {
    %0 = arith.muli %arg1, %arg0 : i32
    %c0_i32 = arith.constant 0 : i32
    %c0_i32_0 = arith.constant 0 : i32
    return %0, %c0_i32 : i32, i32
  }
}

</mosaic_0001>

<llo_original>
// kernel: tpu_custom_call.1
$region0: #{tpu_custom_call.1}
  #allocation0 [shape = 'u32[]', space=smem, size = 0x4, offset = 0x4, fixed_abs, tag = 'smem constant byte address 0x4 - core index']
  #allocation1 [shape = 'u32[144,128]{1,0:T(1,128)}', space=vmem, size = 0x12000, scoped, tag = 'internal scratch']
  #allocation2 [shape = 'f32[1,16,128]{2,1,0:T(8,128)}', space=vmem, size = 0x2000, scoped, tag = 'scratch operand']
  #allocation3 [shape = 'f32[16,128]{1,0:T(8,128)}', space=vmem, size = 0x2000, scoped, tag = 'scratch operand']
  %s0 = inlined_call_operand.hbm [shape: f32[16,128], index: 0, kind: input, shape index: {}]
  %s1 = inlined_call_operand.hbm [shape: f32[16,128], index: 1, kind: output, shape index: {}]
  %s2 = sld [smem:[#allocation0]]
  $region53: #{tpu_custom_call.1} parent=0
    _
  %s4 = ssub.s32 1, %s2
  %s5 = scalar_select 0, %s4, %s2
  $region1: #{tpu_custom_call.1} parent=0
    #allocation4 [shape = 'u8[16384]{0}', space=vmem, size = 0x4000, scoped, tag = 'input window, operand 0']
    #allocation5 [shape = 's32[2]{0}', space=sflag, size = 0x8, scoped, tag = 'scoped memory for tpu_custom_call.1']
    #allocation6 [shape = 's32[2]{0}', space=sflag, size = 0x8, scoped, tag = 'scoped memory for tpu_custom_call.1']
    #allocation7 [shape = 'u8[16384]{0}', space=vmem, size = 0x4000, scoped, tag = 'output window, operand 0']
    %6 = vsyncpa [#allocation5], 0
    %s7 = scalar_lea.sflag [#allocation5], 1
    %8 = vsyncpa %s7, 0
    %9 = vsyncpa [#allocation6], 0
    %s10 = scalar_lea.sflag [#allocation6], 1
    %11 = vsyncpa %s10, 0
    loop: start=0, step=1, limit=4
    $region2: #{tpu_custom_call.1} parent=1 // loop_pre_header
      _
    $region3: #{tpu_custom_call.1} parent=1 // loop_header
      %s13 = sphi 0, %s17
      %p14 = scmp.ge.s32.totalorder %s13, 4
      %s20 = sphi 0, %s32
      %s21 = sphi 0, %s28
      %s22 = sphi 0, %s20
      %s23 = sphi 0, %s21
      %s24 = sphi 0, %s22
      %s25 = sphi 0, %s23
      %s39 = sphi 0, %s41
      %s42 = sphi 0, %s39
      %s43 = sphi 0, %s42
      %s59 = sphi 0, %s43
      %s67 = sphi 0, %s69
      %s70 = sphi 0, %s67
      %s71 = sphi 0, %s70
      %s87 = sphi 0, %s71
    $region4: #{tpu_custom_call.1} parent=1 // loop_header_branch
      %16 = sbr.rel (%p14) target = $region8
    $region5: #{tpu_custom_call.1} parent=1 // loop_body
      %s18 = ssub.s32 %s13, 1
      %s19 = ssub.s32 %s13, 2
      %s26 = sadd.s32 1, %s21
      %p27 = scmp.ge.s32.totalorder %s26, 1
      %s28 = scalar_select %p27, 0, %s26
      %s29 = sadd.s32 1, %s20
      %s30 = scalar_select %p27, %s29, %s20
      %p31 = scmp.ge.s32.totalorder %s30, 2
      %s32 = scalar_select %p31, 0, %s30
      %s33 = ssub.s32 1, %s20
      %s34 = smul.u32 %s21, %s33
      %s35 = ssub.s32 1, %s32
      %s36 = smul.u32 %s28, %s35
      %s37 = ssub.s32 %s34, %s36
      %p38 = scmp.eq.s32.totalorder %s37, 0
      %s40 = sadd.s32 %s39, 1
      %s41 = scalar_select %p38, %s39, %s40
      %p44 = pneg %p38
      %p45 = scmp.eq.s32.totalorder %s13, 1
      %p46 = por %p44, %p45
      %p47 = scmp.ne.s32.totalorder %s39, %s42
      %p48 = scmp.eq.s32.totalorder %s13, 0
      %p49 = por %p47, %p48
      %p50 = scmp.ne.s32.totalorder %s39, %s42
      %p51 = scmp.eq.s32.totalorder %s18, 1
      %p52 = por %p50, %p51
      %p53 = scmp.ne.s32.totalorder %s42, %s43
      %p54 = scmp.eq.s32.totalorder %s18, 0
      %p55 = por %p53, %p54
      %p56 = scmp.ne.s32.totalorder %s42, %s43
      %p57 = scmp.eq.s32.totalorder %s19, 1
      %p58 = por %p56, %p57
      %p60 = scmp.ne.s32.totalorder %s43, %s59
      %p61 = scmp.eq.s32.totalorder %s19, 0
      %p62 = por %p60, %p61
      %s63 = smul.u32 %s21, %s20
      %s64 = smul.u32 %s28, %s32
      %s65 = ssub.s32 %s63, %s64
      %p66 = scmp.eq.s32.totalorder %s65, 0
      %s68 = sadd.s32 %s67, 1
      %s69 = scalar_select %p66, %s67, %s68
      %p72 = pneg %p66
      %p73 = scmp.eq.s32.totalorder %s13, 1
      %p74 = por %p72, %p73
      %p75 = scmp.ne.s32.totalorder %s67, %s70
      %p76 = scmp.eq.s32.totalorder %s13, 0
      %p77 = por %p75, %p76
      %p78 = scmp.ne.s32.totalorder %s67, %s70
      %p79 = scmp.eq.s32.totalorder %s18, 1
      %p80 = por %p78, %p79
      %p81 = scmp.ne.s32.totalorder %s70, %s71
      %p82 = scmp.eq.s32.totalorder %s18, 0
      %p83 = por %p81, %p82
      %p84 = scmp.ne.s32.totalorder %s70, %s71
      %p85 = scmp.eq.s32.totalorder %s19, 1
      %p86 = por %p84, %p85
      %p88 = scmp.ne.s32.totalorder %s71, %s87
      %p89 = scmp.eq.s32.totalorder %s19, 0
      %p90 = por %p88, %p89
      %p91 = scmp.le.s32.totalorder 1, %s13
      %p92 = scmp.lt.s32.totalorder %s13, 3
      %p93 = pnand %p91, %p92
      %p94 = pneg %p93
      // Predicated region
      $region9: #{tpu_custom_call.1} parent=5 // pred_check
        _
      $region10: #{tpu_custom_call.1} parent=5 // pred_check_branch
        %96 = sbr.rel (%p93) target = $region12
      $region11: #{tpu_custom_call.1} parent=5 // pred_region
        %s97 = ssub.s32 %s13, 1
      $region12: #{tpu_custom_call.1} parent=5 // pred_fallthru
        _
      %p98 = scmp.lt.s32.totalorder %s13, 2
      // Predicated region
      $region13: #{tpu_custom_call.1} parent=5 // pred_check
        %p99 = pneg %p98
      $region14: #{tpu_custom_call.1} parent=5 // pred_check_branch
        %101 = sbr.rel (%p99) target = $region16
      $region15: #{tpu_custom_call.1} parent=5 // pred_region
        // Predicated region
        $region17: #{tpu_custom_call.1} parent=15 // pred_check
          %p102 = pneg %p49
        $region18: #{tpu_custom_call.1} parent=15 // pred_check_branch
          %104 = sbr.rel (%p102) target = $region20
        $region19: #{tpu_custom_call.1} parent=15 // pred_region
          %s105 = sand.u32 %s39, 1
          %s106 = scalar_lea.sflag [#allocation5], %s105
          %s107 = sand.u32 %s39, 1
          %s108 = smul.addr %s107, 16
          %s109 = scalar_lea.vmem [#allocation4], %s108
          %s110 = ssub.s32 1, %s20
          %s111 = smul.u32 %s21, %s110
          %s112 = smul.u32 2, %s111
          %s114 = ssub.s32 256, 256
          %115 = vsyncadd %s106, %s114
          %s116 = smul.addr %s112, 128
          %s117 = scalar_lea.hbm %s0, %s116
          %s118 = sshll.u32 %s109, 4
          %s119 = int_to_ptr.vmem [resolvable:$true] %s118
          %124 = dma.hbm_to_vmem [thread:$0]  %s117, 256, %s119, %s106, 128, 128, 8
        $region20: #{tpu_custom_call.1} parent=15 // pred_fallthru
          _
      $region16: #{tpu_custom_call.1} parent=5 // pred_fallthru
        _
      %p125 = scmp.le.s32.totalorder 1, %s13
      %p126 = scmp.lt.s32.totalorder %s13, 3
      %p127 = pnand %p125, %p126
      %p128 = pneg %p127
      // Predicated region
      $region21: #{tpu_custom_call.1} parent=5 // pred_check
        _
      $region22: #{tpu_custom_call.1} parent=5 // pred_check_branch
        %130 = sbr.rel (%p127) target = $region24
      $region23: #{tpu_custom_call.1} parent=5 // pred_region
        %s131 = ssub.s32 %s13, 1
        %s132 = sand.u32 %s42, 1
        %s133 = scalar_lea.sflag [#allocation5], %s132
        %s134 = sand.u32 %s42, 1
        %s135 = smul.addr %s134, 16
        %s136 = scalar_lea.vmem [#allocation4], %s135
        // Predicated region
        $region25: #{tpu_custom_call.1} parent=23 // pred_check
          %p137 = pneg %p55
        $region26: #{tpu_custom_call.1} parent=23 // pred_check_branch
          %139 = sbr.rel (%p137) target = $region28
        $region27: #{tpu_custom_call.1} parent=23 // pred_region
          %140 = dma.done %s133, 256
        $region28: #{tpu_custom_call.1} parent=23 // pred_fallthru
          _
        %s141 = sand.u32 %s42, 1
        %s142 = scalar_lea.sflag [#allocation5], %s141
        %s143 = sand.u32 %s42, 1
        %s144 = smul.addr %s143, 16
        %s145 = scalar_lea.vmem [#allocation4], %s144
        %p146 = pneg %p55
        %p147 = pneg %p52
        %p148 = pneg %p83
        %p149 = pneg %p80
        %s150 = sand.u32 %s70, 1
        %s151 = scalar_lea.sflag [#allocation6], %s150
        %s152 = sand.u32 %s70, 1
        %s153 = smul.addr %s152, 16
        %s154 = scalar_lea.vmem [#allocation7], %s153
        %s155 = ssub.s32 1, %s22
        %s156 = smul.u32 %s23, %s155
        %s157 = smul.u32 2, %s156
        %s158 = smul.u32 %s23, %s22
        %s159 = smul.u32 2, %s158
        %p160 = scmp.eq.s32.totalorder %s22, 0
        // Predicated region
        $region29: #{tpu_custom_call.1} parent=23 // pred_check
          %p161 = pneg %p160
        $region30: #{tpu_custom_call.1} parent=23 // pred_check_branch
          %163 = sbr.rel (%p161) target = $region32
        $region31: #{tpu_custom_call.1} parent=23 // pred_region
          %p164 = scmp.eq.s32.totalorder %s23, 0
          // Predicated region
          $region33: #{tpu_custom_call.1} parent=31 // pred_check
            %p165 = pneg %p164
          $region34: #{tpu_custom_call.1} parent=31 // pred_check_branch
            %167 = sbr.rel (%p165) target = $region36
          $region35: #{tpu_custom_call.1} parent=31 // pred_region
            %168 = vst [vmem:[#allocation3] sm:$0xff] 0.0
            %169 = vst [vmem:[#allocation3 + $0x8] sm:$0xff] 0.0
          $region36: #{tpu_custom_call.1} parent=31 // pred_fallthru
            _
          %v170 = vld [vmem:[%s136] sm:$0xff]
          %v171 = vld [vmem:[%s136 + $0x8] sm:$0xff]
          %s172 = smul.u32 %s23, 16
          %s173 = scalar_lea.vmem [#allocation2], %s172
          %174 = vst [vmem:[%s173] sm:$0xff] %v170
          %175 = vst [vmem:[%s173 + $0x8] sm:$0xff] %v171
          %v176 = vld [vmem:[#allocation3] sm:$0xff]
          %v177 = vld [vmem:[#allocation3 + $0x8] sm:$0xff]
          %v178 = vadd.f32 %v170, 0.0
          %v179 = vadd.f32 %v171, 0.0
          %v180 = vadd.f32 %v176, %v178
          %v181 = vadd.f32 %v177, %v179
          %182 = vst [vmem:[#allocation3] sm:$0xff] %v180
          %183 = vst [vmem:[#allocation3 + $0x8] sm:$0xff] %v181
        $region32: #{tpu_custom_call.1} parent=23 // pred_fallthru
          _
        %p184 = scmp.eq.s32.totalorder %s22, 1
        // Predicated region
        $region37: #{tpu_custom_call.1} parent=23 // pred_check
          %p185 = pneg %p184
        $region38: #{tpu_custom_call.1} parent=23 // pred_check_branch
          %187 = sbr.rel (%p185) target = $region40
        $region39: #{tpu_custom_call.1} parent=23 // pred_region
          %v188 = vld [vmem:[#allocation3] sm:$0xff]
          %v189 = vld [vmem:[#allocation3 + $0x8] sm:$0xff]
          %v190 = vadd.f32 %v188, %v189
          %191 = vadd.xlane.f32.xlu0 %v190
          %v192 = vpop.xlane.xlu0 %191
          %v193 = vrot.slane %v192, 4
          %v194 = vadd.f32 %v192, %v193
          %v195 = vrot.slane %v194, 2
          %v196 = vadd.f32 %v194, %v195
          %v197 = vrot.slane %v196, 1
          %v198 = vadd.f32 %v196, %v197
          %s199 = vtos %v198
          %s200 = smul.f32 %s199, 0.00048828125
          %s201 = smul.u32 %s23, 16
          %s202 = scalar_lea.vmem [#allocation2], %s201
          %v203 = vld [vmem:[%s202] sm:$0xff]
          %v204 = vld [vmem:[%s202 + $0x8] sm:$0xff]
          %v205 = vstv %s200
          %v206 = vsub.f32 %v203, %v205
          %v207 = vsub.f32 %v204, %v205
          %208 = vst [vmem:[%s154] sm:$0xff] %v206
          %209 = vst [vmem:[%s154 + $0x8] sm:$0xff] %v207
        $region40: #{tpu_custom_call.1} parent=23 // pred_fallthru
          _
        %s210 = sand.u32 %s70, 1
        %s211 = scalar_lea.sflag [#allocation6], %s210
        %s212 = sand.u32 %s70, 1
        %s213 = smul.addr %s212, 16
        %s214 = scalar_lea.vmem [#allocation7], %s213
        // Predicated region
        $region41: #{tpu_custom_call.1} parent=23 // pred_check
          %p215 = pneg %p80
        $region42: #{tpu_custom_call.1} parent=23 // pred_check_branch
          %217 = sbr.rel (%p215) target = $region44
        $region43: #{tpu_custom_call.1} parent=23 // pred_region
          %s218 = smul.u32 %s23, %s22
          %s219 = smul.u32 2, %s218
          %s221 = ssub.s32 256, 256
          %222 = vsyncadd %s211, %s221
          %s223 = smul.addr %s219, 128
          %s224 = scalar_lea.hbm %s1, %s223
          %s225 = sshll.u32 %s214, 4
          %s226 = int_to_ptr.vmem [resolvable:$true] %s225
          %231 = dma.vmem_to_hbm [thread:$0]  %s226, 256, %s224, %s211, 128, 128, 8
        $region44: #{tpu_custom_call.1} parent=23 // pred_fallthru
          _
      $region24: #{tpu_custom_call.1} parent=5 // pred_fallthru
        _
      %p232 = scmp.le.s32.totalorder 2, %s13
      // Predicated region
      $region45: #{tpu_custom_call.1} parent=5 // pred_check
        %p233 = pneg %p232
      $region46: #{tpu_custom_call.1} parent=5 // pred_check_branch
        %235 = sbr.rel (%p233) target = $region48
      $region47: #{tpu_custom_call.1} parent=5 // pred_region
        %s236 = ssub.s32 %s13, 2
        // Predicated region
        $region49: #{tpu_custom_call.1} parent=47 // pred_check
          %p237 = pneg %p86
        $region50: #{tpu_custom_call.1} parent=47 // pred_check_branch
          %239 = sbr.rel (%p237) target = $region52
        $region51: #{tpu_custom_call.1} parent=47 // pred_region
          %s240 = sand.u32 %s71, 1
          %s241 = scalar_lea.sflag [#allocation6], %s240
          %s242 = sand.u32 %s71, 1
          %s243 = smul.addr %s242, 16
          %s244 = scalar_lea.vmem [#allocation7], %s243
          %245 = dma.done %s241, 256
        $region52: #{tpu_custom_call.1} parent=47 // pred_fallthru
          _
      $region48: #{tpu_custom_call.1} parent=5 // pred_fallthru
        _
    $region6: #{tpu_custom_call.1} parent=1 // loop_footer
      %s17 = sadd.s32 1, %s13
    $region7: #{tpu_custom_call.1} parent=1 // loop_footer_branch
      %12 = sbr.rel target = $region3
    $region8: #{tpu_custom_call.1} parent=1 // loop_exit
      _
    %246 = vsyncpa [#allocation5], 1
    %s247 = scalar_lea.sflag [#allocation5], 1
    %248 = vsyncpa %s247, 1
    %249 = vsyncpa [#allocation6], 1
    %s250 = scalar_lea.sflag [#allocation6], 1
    %251 = vsyncpa %s250, 1

</llo_original>
